<compile_context>
chip_gen: v6e
topology: v6e:2x2x1
jax: 0.10.0
libtpu: 0.0.40
codegen_flags: <defaults>
</compile_context>

<pallas_src>
import functools

import jax
import jax.numpy as jnp
import numpy as np
from jax.experimental import pallas as pl
from jax.experimental.pallas import tpu as pltpu

KH = KW = 3       # conv kernel size of the synthetic backbone stem
LANE = 128        # TPU lane width
SUBLANE16 = 16    # bf16 sublane packing granularity


def _round_up(n, m):
    return ((n + m - 1) // m) * m


def _pick_spatial_tiling(hw, max_tile):
    """Return (TM, HW_padded, S): TM multiple of 16, S*TM >= hw, minimal padding."""
    n_tiles = -(-hw // max_tile)                       # ceil-div
    tm = _round_up(-(-hw // n_tiles), SUBLANE16)
    return tm, tm * n_tiles, n_tiles


def _birdclef_kernel(inv_hw,
                     slab_ref, wconv_ref, wcls_ref, bcls_ref,
                     out_ref, pool_ref):
    """One (batch b, spatial-tile s) grid step.

    slab_ref : (1, TM, Kp)  bf16  im2col tile (ones column folds the conv bias)
    wconv_ref: (Kp, Cfp)    bf16  tap-major conv weight + bias row (zero-padded)
    wcls_ref : (Cfp, NCp)   f32   classifier weight (x @ W layout, zero-padded)
    bcls_ref : (1, NCp)     f32   classifier bias
    out_ref  : (1, 1, NCp)  f32   logits row for this batch element
    pool_ref : (1, Cfp)     f32   running pooled-sum scratch (per batch element)
    """
    s = pl.program_id(1)

    @pl.when(s == 0)
    def _():
        pool_ref[...] = jnp.zeros_like(pool_ref)

    # Fused conv-as-matmul (bias folded into the last valid K row): one MXU push.
    act = jnp.maximum(
        jnp.dot(slab_ref[0], wconv_ref[...],
                preferred_element_type=jnp.float32), 0.0)         # (TM, Cfp) f32

    # Global average pool: cross-sublane sum on the XLU (MXU slot stays free).
    pool_ref[...] += jnp.sum(act, axis=0, keepdims=True)          # (1, Cfp)

    @pl.when(s == pl.num_programs(1) - 1)
    def _():
        pooled = pool_ref[...] * inv_hw                           # mean over true H*W
        logits = jnp.dot(pooled, wcls_ref[...],
                         preferred_element_type=jnp.float32) + bcls_ref[...]
        out_ref[...] = logits.reshape(1, 1, -1)


def birdclef_forward(x_nchw, wconv, bconv, wcls, bcls, *, max_spatial_tile=2048):
    """x_nchw: (B, Cin, H, W) float32 (PyTorch NCHW convention). Returns (B, NC)."""
    B, Cin, H, W = x_nchw.shape
    Cf = wconv.shape[0]
    NC = wcls.shape[0]
    HW = H * W
    K = KH * KW * Cin

    Kp = _round_up(K + 1, SUBLANE16)            # +1: folded conv-bias column
    Cfp = _round_up(Cf, LANE)
    NCp = _round_up(NC, LANE)
    TM, HWp, S = _pick_spatial_tiling(HW, max_spatial_tile)

    # ---- Layout plumbing stays in plain JAX: NCHW->NHWC, pad, im2col, bias col.
    x = jnp.transpose(x_nchw, (0, 2, 3, 1))                        # NHWC
    x_pad = jnp.pad(x, ((0, 0), (1, 1), (1, 1), (0, 0)))           # conv padding=1
    patches = [x_pad[:, ky:ky + H, kx:kx + W, :]
               for ky in range(KH) for kx in range(KW)]
    slab = jnp.concatenate(patches, axis=-1).reshape(B, HW, K)     # im2col
    ones_col = jnp.ones((B, HW, 1), dtype=slab.dtype)              # folds conv bias
    slab = jnp.concatenate([slab, ones_col], axis=-1)              # (B, HW, K+1)
    # Zero-pad K+1 -> Kp columns and HW -> HWp rows: padded rows are all-zero
    # (including the bias column), so they contribute exactly 0 after conv+ReLU.
    slab = jnp.pad(slab, ((0, 0), (0, HWp - HW),
                          (0, Kp - K - 1))).astype(jnp.bfloat16)

    # PyTorch conv weight (Cf, Cin, 3, 3) -> tap-major (K, Cf); bias appended as
    # the (K+1)-th row; zero-padded to (Kp, Cfp), bf16.
    w_taps = jnp.transpose(wconv, (2, 3, 1, 0)).reshape(K, Cf)
    w_conv = jnp.concatenate([w_taps, bconv.reshape(1, Cf)], axis=0)
    w_conv = jnp.pad(w_conv, ((0, Kp - K - 1), (0, Cfp - Cf))).astype(jnp.bfloat16)

    # PyTorch Linear: y = x @ W.T + b. Tiny (M=1) classifier kept in f32.
    w_cls = jnp.pad(wcls.T, ((0, Cfp - Cf), (0, NCp - NC))).astype(jnp.float32)
    b_cls = jnp.pad(bcls, (0, NCp - NC)).reshape(1, NCp).astype(jnp.float32)

    kernel = functools.partial(_birdclef_kernel, 1.0 / HW)

    out = pl.pallas_call(
        kernel,
        out_shape=jax.ShapeDtypeStruct((B, 1, NCp), jnp.float32),
        grid_spec=pltpu.PrefetchScalarGridSpec(
            num_scalar_prefetch=0,
            grid=(B, S),                                           # reduction axis last
            in_specs=[
                pl.BlockSpec((1, TM, Kp), lambda b, s: (b, s, 0)),    # im2col slab tile
                pl.BlockSpec((Kp, Cfp), lambda b, s: (0, 0)),         # conv weight+bias
                pl.BlockSpec((Cfp, NCp), lambda b, s: (0, 0)),        # classifier weight
                pl.BlockSpec((1, NCp), lambda b, s: (0, 0)),          # classifier bias
            ],
            out_specs=pl.BlockSpec((1, 1, NCp), lambda b, s: (b, 0, 0)),
            scratch_shapes=[pltpu.VMEM((1, Cfp), jnp.float32)],       # pooled-sum acc
        ),
        compiler_params=pltpu.CompilerParams(
            dimension_semantics=("parallel", "arbitrary"),
            vmem_limit_bytes=48 * 1024 * 1024),
    )(slab, w_conv, w_cls, b_cls)

    return out.reshape(B, NCp)[:, :NC]


def birdclef_reference(x_nchw, wconv, bconv, wcls, bcls):
    """Pure-JAX f32 reference of the same forward pass."""
    x = jnp.transpose(x_nchw, (0, 2, 3, 1))                        # NHWC
    feats = jax.lax.conv_general_dilated(
        x, jnp.transpose(wconv, (2, 3, 1, 0)),                     # HWIO
        window_strides=(1, 1), padding="SAME",
        dimension_numbers=("NHWC", "HWIO", "NHWC"))
    feats = jnp.maximum(feats + bconv[None, None, None, :], 0.0)
    pooled = jnp.mean(feats, axis=(1, 2))                          # (B, Cf)
    return pooled @ wcls.T + bcls[None, :]


if __name__ == "__main__":
    # Small shapes consistent with the module's forward:
    # x: (batch=2, in_channels=4, H=16, W=16), feat_dim=32, num_classes=8.
    B, Cin, H, W = 2, 4, 16, 16
    FEAT_DIM, NUM_CLASSES = 32, 8

    key = jax.random.PRNGKey(0)
    kx, kw1, kb1, kw2, kb2 = jax.random.split(key, 5)

    x = jax.random.normal(kx, (B, Cin, H, W), dtype=jnp.float32)
    # Synthetic backbone stem conv (feat_dim, in_channels, 3, 3) + bias.
    wconv = 0.1 * jax.random.normal(kw1, (FEAT_DIM, Cin, KH, KW), dtype=jnp.float32)
    bconv = 0.1 * jax.random.normal(kb1, (FEAT_DIM,), dtype=jnp.float32)
    # Classifier: nn.Linear(feat_dim, num_classes) -> weight (NC, Cf), bias (NC,).
    wcls = 0.1 * jax.random.normal(kw2, (NUM_CLASSES, FEAT_DIM), dtype=jnp.float32)
    bcls = 0.1 * jax.random.normal(kb2, (NUM_CLASSES,), dtype=jnp.float32)

    logits = jax.block_until_ready(birdclef_forward(x, wconv, bconv, wcls, bcls))
    ref = jax.block_until_ready(birdclef_reference(x, wconv, bconv, wcls, bcls))

    # bf16 MXU operands for the conv (f32 accumulation, f32 classifier)
    # -> relaxed tolerance vs the f32 reference.
    np.testing.assert_allclose(np.asarray(logits), np.asarray(ref),
                               rtol=5e-2, atol=2e-2)
    assert logits.shape == (B, NUM_CLASSES)
    print("KERNEL_OK")
</pallas_src>

<mosaic_0001>
module attributes {stable_mosaic.version = 11 : i64} {
  func.func @_birdclef_kernel(%arg0: i32, %arg1: i32, %arg2: memref<1x256x48xbf16, #tpu.memory_space<vmem>>, %arg3: memref<48x128xbf16, #tpu.memory_space<vmem>>, %arg4: memref<128x128xf32, #tpu.memory_space<vmem>>, %arg5: memref<1x128xf32, #tpu.memory_space<vmem>>, %arg6: memref<1x1x128xf32, #tpu.memory_space<vmem>>, %arg7: memref<1x128xf32, #tpu.memory_space<vmem>>) attributes {dimension_semantics = [#tpu.dimension_semantics<parallel>, #tpu.dimension_semantics<arbitrary>], iteration_bounds = array<i64: 2, 1>, scalar_prefetch = 0 : i64, scratch_operands = 1 : i64, tpu.core_type = #tpu.core_type<tc>, window_params = [{transform_indices = @transform_0, window_bounds = array<i64: 1, 256, 48>}, {pipeline_mode = #tpu.pipeline_mode<synchronous>, transform_indices = @transform_1, window_bounds = array<i64: 48, 128>}, {pipeline_mode = #tpu.pipeline_mode<synchronous>, transform_indices = @transform_2, window_bounds = array<i64: 128, 128>}, {pipeline_mode = #tpu.pipeline_mode<synchronous>, transform_indices = @transform_3, window_bounds = array<i64: 1, 128>}, {transform_indices = @transform_4, window_bounds = array<i64: 1, 1, 128>}]} {
    %c0_i32 = arith.constant 0 : i32
    %0 = arith.cmpi eq, %arg1, %c0_i32 : i32
    %1 = arith.extui %0 : i1 to i32
    %c0_i32_0 = arith.constant 0 : i32
    %2 = arith.cmpi ne, %1, %c0_i32_0 : i32
    scf.if %2 {
      %cst_13 = arith.constant 0.000000e+00 : f32
      %17 = vector.broadcast %cst_13 : f32 to vector<1x128xf32>
      %c0_14 = arith.constant 0 : index
      %c0_15 = arith.constant 0 : index
      %18 = vector.load %arg7[%c0_14, %c0_15] : memref<1x128xf32, #tpu.memory_space<vmem>>, vector<1x128xf32>
      tpu.vector_store %arg7[%c0_14, %c0_15], %17 {strides = array<i32>} : memref<1x128xf32, #tpu.memory_space<vmem>>, vector<1x128xf32>,
    } else {
    }
    %c0 = arith.constant 0 : index
    %c0_1 = arith.constant 0 : index
    %c0_2 = arith.constant 0 : index
    %3 = vector.load %arg2[%c0, %c0_1, %c0_2] : memref<1x256x48xbf16, #tpu.memory_space<vmem>>, vector<1x256x48xbf16>
    %4 = vector.shape_cast %3 : vector<1x256x48xbf16> to vector<256x48xbf16>
    %c0_3 = arith.constant 0 : index
    %c0_4 = arith.constant 0 : index
    %5 = vector.load %arg3[%c0_3, %c0_4] : memref<48x128xbf16, #tpu.memory_space<vmem>>, vector<48x128xbf16>
    %cst = arith.constant dense<0.000000e+00> : vector<256x128xf32>
    %6 = tpu.matmul %4, %5, %cst {dimension_numbers = #tpu.dot_dimension_numbers<[1], [0], [0], [1], [0, 0, 1, 1], [], []>} : vector<256x48xbf16>, vector<48x128xbf16>, vector<256x128xf32> -> vector<256x128xf32>
    %cst_5 = arith.constant 0.000000e+00 : f32
    %7 = vector.broadcast %cst_5 : f32 to vector<256x128xf32>
    %8 = arith.maximumf %6, %7 : vector<256x128xf32>
    %c0_6 = arith.constant 0 : index
    %c0_7 = arith.constant 0 : index
    %9 = vector.load %arg7[%c0_6, %c0_7] : memref<1x128xf32, #tpu.memory_space<vmem>>, vector<1x128xf32>
    %cst_8 = arith.constant dense<0.000000e+00> : vector<128xf32>
    %10 = vector.multi_reduction <add>, %8, %cst_8 [0] : vector<256x128xf32> to vector<128xf32>
    %11 = vector.shape_cast %10 : vector<128xf32> to vector<1x128xf32>
    %12 = arith.addf %9, %11 : vector<1x128xf32>
    %c0_9 = arith.constant 0 : index
    %c0_10 = arith.constant 0 : index
    %13 = vector.load %arg7[%c0_9, %c0_10] : memref<1x128xf32, #tpu.memory_space<vmem>>, vector<1x128xf32>
    tpu.vector_store %arg7[%c0_9, %c0_10], %12 {strides = array<i32>} : memref<1x128xf32, #tpu.memory_space<vmem>>, vector<1x128xf32>,
    %c0_i32_11 = arith.constant 0 : i32
    %14 = arith.cmpi eq, %arg1, %c0_i32_11 : i32
    %15 = arith.extui %14 : i1 to i32
    %c0_i32_12 = arith.constant 0 : i32
    %16 = arith.cmpi ne, %15, %c0_i32_12 : i32
    scf.if %16 {
      %c0_13 = arith.constant 0 : index
      %c0_14 = arith.constant 0 : index
      %17 = vector.load %arg7[%c0_13, %c0_14] : memref<1x128xf32, #tpu.memory_space<vmem>>, vector<1x128xf32>
      %cst_15 = arith.constant 3.906250e-03 : f32
      %18 = vector.broadcast %cst_15 : f32 to vector<1x128xf32>
      %19 = arith.mulf %17, %18 : vector<1x128xf32>
      %c0_16 = arith.constant 0 : index
      %c0_17 = arith.constant 0 : index
      %20 = vector.load %arg4[%c0_16, %c0_17] : memref<128x128xf32, #tpu.memory_space<vmem>>, vector<128x128xf32>
      %cst_18 = arith.constant dense<0.000000e+00> : vector<1x128xf32>
      %21 = tpu.matmul %19, %20, %cst_18 {dimension_numbers = #tpu.dot_dimension_numbers<[1], [0], [0], [1], [0, 0, 1, 1], [], []>} : vector<1x128xf32>, vector<128x128xf32>, vector<1x128xf32> -> vector<1x128xf32>
      %c0_19 = arith.constant 0 : index
      %c0_20 = arith.constant 0 : index
      %22 = vector.load %arg5[%c0_19, %c0_20] : memref<1x128xf32, #tpu.memory_space<vmem>>, vector<1x128xf32>
      %23 = arith.addf %21, %22 : vector<1x128xf32>
      %24 = vector.shape_cast %23 : vector<1x128xf32> to vector<1x1x128xf32>
      %c0_21 = arith.constant 0 : index
      %c0_22 = arith.constant 0 : index
      %c0_23 = arith.constant 0 : index
      %25 = vector.load %arg6[%c0_21, %c0_22, %c0_23] : memref<1x1x128xf32, #tpu.memory_space<vmem>>, vector<1x1x128xf32>
      tpu.vector_store %arg6[%c0_21, %c0_22, %c0_23], %24 {strides = array<i32>} : memref<1x1x128xf32, #tpu.memory_space<vmem>>, vector<1x1x128xf32>,
    } else {
    }
    return
  }
  func.func @transform_0(%arg0: i32, %arg1: i32) -> (i32, i32, i32) {
    %c0_i32 = arith.constant 0 : i32
    %c0_i32_0 = arith.constant 0 : i32
    return %arg0, %arg1, %c0_i32 : i32, i32, i32
  }
  func.func @transform_1(%arg0: i32, %arg1: i32) -> (i32, i32) {
    %c0_i32 = arith.constant 0 : i32
    %c0_i32_0 = arith.constant 0 : i32
    %c0_i32_1 = arith.constant 0 : i32
    return %c0_i32, %c0_i32_0 : i32, i32
  }
  func.func @transform_2(%arg0: i32, %arg1: i32) -> (i32, i32) {
    %c0_i32 = arith.constant 0 : i32
    %c0_i32_0 = arith.constant 0 : i32
    %c0_i32_1 = arith.constant 0 : i32
    return %c0_i32, %c0_i32_0 : i32, i32
  }
  func.func @transform_3(%arg0: i32, %arg1: i32) -> (i32, i32) {
    %c0_i32 = arith.constant 0 : i32
    %c0_i32_0 = arith.constant 0 : i32
    %c0_i32_1 = arith.constant 0 : i32
    return %c0_i32, %c0_i32_0 : i32, i32
  }
  func.func @transform_4(%arg0: i32, %arg1: i32) -> (i32, i32, i32) {
    %c0_i32 = arith.constant 0 : i32
    %c0_i32_0 = arith.constant 0 : i32
    %c0_i32_1 = arith.constant 0 : i32
    return %arg0, %c0_i32, %c0_i32_0 : i32, i32, i32
  }
}

</mosaic_0001>

<llo_original>
// kernel: tpu_custom_call.1
$region0: #{tpu_custom_call.1}
  #allocation0 [shape = 'u32[]', space=smem, size = 0x4, offset = 0x4, fixed_abs, tag = 'smem constant byte address 0x4 - core index']
  #allocation1 [shape = 'u32[144,128]{1,0:T(1,128)}', space=vmem, size = 0x12000, scoped, tag = 'internal scratch']
  #allocation2 [shape = 'f32[1,128]{1,0:T(1,128)}', space=vmem, size = 0x200, scoped, tag = 'scratch operand']
  %s0 = inlined_call_operand.vmem [shape: bf16[2,256,48], index: 0, kind: input, shape index: {}]
  %s1 = inlined_call_operand.vmem [shape: bf16[48,128], index: 1, kind: input, shape index: {}]
  %s2 = inlined_call_operand.vmem [shape: f32[128,128], index: 2, kind: input, shape index: {}]
  %s3 = inlined_call_operand.vmem [shape: f32[1,128], index: 3, kind: input, shape index: {}]
  %s4 = inlined_call_operand.hbm [shape: f32[2,1,128], index: 4, kind: output, shape index: {}]
  %s5 = sld [smem:[#allocation0]]
  $region57: #{tpu_custom_call.1} parent=0
    _
  %s7 = ssub.s32 1, %s5
  %s8 = scalar_select 0, %s7, %s5
  $region1: #{tpu_custom_call.1} parent=0
    #allocation3 [shape = 'u8[1024]{0}', space=vmem, size = 0x400, scoped, tag = 'output window, operand 0']
    #allocation4 [shape = 's32[2]{0}', space=sflag, size = 0x8, scoped, tag = 'scoped memory for tpu_custom_call.1']
    %9 = vsyncpa [#allocation4], 0
    %s10 = scalar_lea.sflag [#allocation4], 1
    %11 = vsyncpa %s10, 0
    loop: start=0, step=1, limit=4
    $region2: #{tpu_custom_call.1} parent=1 // loop_pre_header
      _
    $region3: #{tpu_custom_call.1} parent=1 // loop_header
      %s13 = sphi 0, %s17
      %p14 = scmp.ge.s32.totalorder %s13, 4
      %s20 = sphi 0, %s32
      %s21 = sphi 0, %s28
      %s22 = sphi 0, %s20
      %s23 = sphi 0, %s21
      %s24 = sphi 0, %s22
      %s25 = sphi 0, %s23
      %s37 = sphi 0, %s39
      %s40 = sphi 0, %s37
      %s41 = sphi 0, %s40
      %s57 = sphi 0, %s41
      %s61 = sphi 0, %s61
      %s63 = sphi 0, %s61
      %s64 = sphi 0, %s63
      %s78 = sphi 0, %s64
      %s82 = sphi 0, %s82
      %s84 = sphi 0, %s82
      %s85 = sphi 0, %s84
      %s99 = sphi 0, %s85
      %s103 = sphi 0, %s103
      %s105 = sphi 0, %s103
      %s106 = sphi 0, %s105
      %s120 = sphi 0, %s106
      %s126 = sphi 0, %s128
      %s129 = sphi 0, %s126
      %s130 = sphi 0, %s129
      %s146 = sphi 0, %s130
    $region4: #{tpu_custom_call.1} parent=1 // loop_header_branch
      %16 = sbr.rel (%p14) target = $region8
    $region5: #{tpu_custom_call.1} parent=1 // loop_body
      %s18 = ssub.s32 %s13, 1
      %s19 = ssub.s32 %s13, 2
      %s26 = sadd.s32 1, %s21
      %p27 = scmp.ge.s32.totalorder %s26, 1
      %s28 = scalar_select %p27, 0, %s26
      %s29 = sadd.s32 1, %s20
      %s30 = scalar_select %p27, %s29, %s20
      %p31 = scmp.ge.s32.totalorder %s30, 2
      %s32 = scalar_select %p31, 0, %s30
      %s33 = ssub.s32 %s20, %s32
      %s34 = ssub.s32 %s21, %s28
      %s35 = sor.u32 %s33, %s34
      %p36 = scmp.eq.s32.totalorder %s35, 0
      %s38 = sadd.s32 %s37, 1
      %s39 = scalar_select %p36, %s37, %s38
      %p42 = pneg %p36
      %p43 = scmp.eq.s32.totalorder %s13, 1
      %p44 = por %p42, %p43
      %p45 = scmp.ne.s32.totalorder %s37, %s40
      %p46 = scmp.eq.s32.totalorder %s13, 0
      %p47 = por %p45, %p46
      %p48 = scmp.ne.s32.totalorder %s37, %s40
      %p49 = scmp.eq.s32.totalorder %s18, 1
      %p50 = por %p48, %p49
      %p51 = scmp.ne.s32.totalorder %s40, %s41
      %p52 = scmp.eq.s32.totalorder %s18, 0
      %p53 = por %p51, %p52
      %p54 = scmp.ne.s32.totalorder %s40, %s41
      %p55 = scmp.eq.s32.totalorder %s19, 1
      %p56 = por %p54, %p55
      %p58 = scmp.ne.s32.totalorder %s41, %s57
      %p59 = scmp.eq.s32.totalorder %s19, 0
      %p60 = por %p58, %p59
      %s62 = sadd.s32 %s61, 1
      %p65 = scmp.eq.s32.totalorder %s13, 1
      %p66 = scmp.ne.s32.totalorder %s61, %s63
      %p67 = scmp.eq.s32.totalorder %s13, 0
      %p68 = por %p66, %p67
      %p69 = scmp.ne.s32.totalorder %s61, %s63
      %p70 = scmp.eq.s32.totalorder %s18, 1
      %p71 = por %p69, %p70
      %p72 = scmp.ne.s32.totalorder %s63, %s64
      %p73 = scmp.eq.s32.totalorder %s18, 0
      %p74 = por %p72, %p73
      %p75 = scmp.ne.s32.totalorder %s63, %s64
      %p76 = scmp.eq.s32.totalorder %s19, 1
      %p77 = por %p75, %p76
      %p79 = scmp.ne.s32.totalorder %s64, %s78
      %p80 = scmp.eq.s32.totalorder %s19, 0
      %p81 = por %p79, %p80
      %s83 = sadd.s32 %s82, 1
      %p86 = scmp.eq.s32.totalorder %s13, 1
      %p87 = scmp.ne.s32.totalorder %s82, %s84
      %p88 = scmp.eq.s32.totalorder %s13, 0
      %p89 = por %p87, %p88
      %p90 = scmp.ne.s32.totalorder %s82, %s84
      %p91 = scmp.eq.s32.totalorder %s18, 1
      %p92 = por %p90, %p91
      %p93 = scmp.ne.s32.totalorder %s84, %s85
      %p94 = scmp.eq.s32.totalorder %s18, 0
      %p95 = por %p93, %p94
      %p96 = scmp.ne.s32.totalorder %s84, %s85
      %p97 = scmp.eq.s32.totalorder %s19, 1
      %p98 = por %p96, %p97
      %p100 = scmp.ne.s32.totalorder %s85, %s99
      %p101 = scmp.eq.s32.totalorder %s19, 0
      %p102 = por %p100, %p101
      %s104 = sadd.s32 %s103, 1
      %p107 = scmp.eq.s32.totalorder %s13, 1
      %p108 = scmp.ne.s32.totalorder %s103, %s105
      %p109 = scmp.eq.s32.totalorder %s13, 0
      %p110 = por %p108, %p109
      %p111 = scmp.ne.s32.totalorder %s103, %s105
      %p112 = scmp.eq.s32.totalorder %s18, 1
      %p113 = por %p111, %p112
      %p114 = scmp.ne.s32.totalorder %s105, %s106
      %p115 = scmp.eq.s32.totalorder %s18, 0
      %p116 = por %p114, %p115
      %p117 = scmp.ne.s32.totalorder %s105, %s106
      %p118 = scmp.eq.s32.totalorder %s19, 1
      %p119 = por %p117, %p118
      %p121 = scmp.ne.s32.totalorder %s106, %s120
      %p122 = scmp.eq.s32.totalorder %s19, 0
      %p123 = por %p121, %p122
      %s124 = ssub.s32 %s20, %s32
      %p125 = scmp.eq.s32.totalorder %s124, 0
      %s127 = sadd.s32 %s126, 1
      %s128 = scalar_select %p125, %s126, %s127
      %p131 = pneg %p125
      %p132 = scmp.eq.s32.totalorder %s13, 1
      %p133 = por %p131, %p132
      %p134 = scmp.ne.s32.totalorder %s126, %s129
      %p135 = scmp.eq.s32.totalorder %s13, 0
      %p136 = por %p134, %p135
      %p137 = scmp.ne.s32.totalorder %s126, %s129
      %p138 = scmp.eq.s32.totalorder %s18, 1
      %p139 = por %p137, %p138
      %p140 = scmp.ne.s32.totalorder %s129, %s130
      %p141 = scmp.eq.s32.totalorder %s18, 0
      %p142 = por %p140, %p141
      %p143 = scmp.ne.s32.totalorder %s129, %s130
      %p144 = scmp.eq.s32.totalorder %s19, 1
      %p145 = por %p143, %p144
      %p147 = scmp.ne.s32.totalorder %s130, %s146
      %p148 = scmp.eq.s32.totalorder %s19, 0
      %p149 = por %p147, %p148
      %p150 = scmp.le.s32.totalorder 1, %s13
      %p151 = scmp.lt.s32.totalorder %s13, 3
      %p152 = pnand %p150, %p151
      %p153 = pneg %p152
      // Predicated region
      $region9: #{tpu_custom_call.1} parent=5 // pred_check
        _
      $region10: #{tpu_custom_call.1} parent=5 // pred_check_branch
        %155 = sbr.rel (%p152) target = $region12
      $region11: #{tpu_custom_call.1} parent=5 // pred_region
        %s156 = ssub.s32 %s13, 1
        // Predicated region
        $region13: #{tpu_custom_call.1} parent=11 // pred_check
          %p157 = pneg %p74
        $region14: #{tpu_custom_call.1} parent=11 // pred_check_branch
          %159 = sbr.rel (%p157) target = $region16
        $region15: #{tpu_custom_call.1} parent=11 // pred_region
          _
        $region16: #{tpu_custom_call.1} parent=11 // pred_fallthru
          _
        // Predicated region
        $region17: #{tpu_custom_call.1} parent=11 // pred_check
          %p160 = pneg %p95
        $region18: #{tpu_custom_call.1} parent=11 // pred_check_branch
          %162 = sbr.rel (%p160) target = $region20
        $region19: #{tpu_custom_call.1} parent=11 // pred_region
          _
        $region20: #{tpu_custom_call.1} parent=11 // pred_fallthru
          _
        // Predicated region
        $region21: #{tpu_custom_call.1} parent=11 // pred_check
          %p163 = pneg %p116
        $region22: #{tpu_custom_call.1} parent=11 // pred_check_branch
          %165 = sbr.rel (%p163) target = $region24
        $region23: #{tpu_custom_call.1} parent=11 // pred_region
          _
        $region24: #{tpu_custom_call.1} parent=11 // pred_fallthru
          _
      $region12: #{tpu_custom_call.1} parent=5 // pred_fallthru
        _
      %p166 = scmp.lt.s32.totalorder %s13, 2
      // Predicated region
      $region25: #{tpu_custom_call.1} parent=5 // pred_check
        %p167 = pneg %p166
      $region26: #{tpu_custom_call.1} parent=5 // pred_check_branch
        %169 = sbr.rel (%p167) target = $region28
      $region27: #{tpu_custom_call.1} parent=5 // pred_region
        // Predicated region
        $region29: #{tpu_custom_call.1} parent=27 // pred_check
          %p170 = pneg %p47
        $region30: #{tpu_custom_call.1} parent=27 // pred_check_branch
          %172 = sbr.rel (%p170) target = $region32
        $region31: #{tpu_custom_call.1} parent=27 // pred_region
          %s173 = smul.u32 32, %s21
          %p174 = scmp.lt.s32.totalorder %s20, 1
          %s175 = scalar_select %p174, %s20, 1
          %p176 = scmp.lt.s32.totalorder %s173, 31
          %s177 = scalar_select %p176, %s173, 31
          %s178 = smul.addr %s175, 32
          %s179 = sadd.s32 %s177, %s178
          %s180 = smul.addr %s179, 4
          %s181 = scalar_lea.vmem %s0, %s180
          %s182 = smul.u32 32, %s21
        $region32: #{tpu_custom_call.1} parent=27 // pred_fallthru
          _
      $region28: #{tpu_custom_call.1} parent=5 // pred_fallthru
        _
      %p183 = scmp.le.s32.totalorder 1, %s13
      %p184 = scmp.lt.s32.totalorder %s13, 3
      %p185 = pnand %p183, %p184
      %p186 = pneg %p185
      // Predicated region
      $region33: #{tpu_custom_call.1} parent=5 // pred_check
        _
      $region34: #{tpu_custom_call.1} parent=5 // pred_check_branch
        %188 = sbr.rel (%p185) target = $region36
      $region35: #{tpu_custom_call.1} parent=5 // pred_region
        %s189 = ssub.s32 %s13, 1
        %s190 = smul.u32 32, %s23
        %p191 = scmp.lt.s32.totalorder %s22, 1
        %s192 = scalar_select %p191, %s22, 1
        %p193 = scmp.lt.s32.totalorder %s190, 31
        %s194 = scalar_select %p193, %s190, 31
        %s195 = smul.addr %s192, 32
        %s196 = sadd.s32 %s194, %s195
        %s197 = smul.addr %s196, 4
        %s198 = scalar_lea.vmem %s0, %s197
        %p199 = pneg %p53
        %p200 = pneg %p50
        %p201 = pneg %p74
        %p202 = pneg %p71
        %p203 = pneg %p95
        %p204 = pneg %p92
        %p205 = pneg %p116
        %p206 = pneg %p113
        %p207 = pneg %p142
        %p208 = pneg %p139
        %s209 = sand.u32 %s129, 1
        %s210 = scalar_lea.sflag [#allocation4], %s209
        %s211 = sand.u32 %s129, 1
        %s212 = scalar_lea.vmem [#allocation3], %s211
        %s213 = smul.u32 32, %s23
        %p214 = scmp.lt.s32.totalorder %s22, 1
        %s215 = scalar_select %p214, %s22, 1
        %p216 = scmp.lt.s32.totalorder %s213, 31
        %s217 = scalar_select %p216, %s213, 31
        %s218 = smul.addr %s215, 32
        %s219 = sadd.s32 %s217, %s218
        %s220 = smul.addr %s219, 4
        %s221 = scalar_lea.vmem %s0, %s220
        %s222 = smul.u32 32, %s23
        %p224 = scmp.eq.s32.totalorder %s23, 0
        // Predicated region
        $region37: #{tpu_custom_call.1} parent=35 // pred_check
          %p225 = pneg %p224
        $region38: #{tpu_custom_call.1} parent=35 // pred_check_branch
          %227 = sbr.rel (%p225) target = $region40
        $region39: #{tpu_custom_call.1} parent=35 // pred_region
          %228 = vst [vmem:[#allocation2] sm:$0x1] 0.0
        $region40: #{tpu_custom_call.1} parent=35 // pred_fallthru
          _
        %v229 = vld [vmem:[%s221] sm:$0xf]
        %v230 = vld [vmem:[%s221 + $0x4] sm:$0xf]
        %v231 = vld [vmem:[%s221 + $0x8] sm:$0xf]
        %v232 = vld [vmem:[%s221 + $0xc] sm:$0xf]
        %v233 = vld [vmem:[%s221 + $0x10] sm:$0xf]
        %v234 = vld [vmem:[%s221 + $0x14] sm:$0xf]
        %v235 = vld [vmem:[%s221 + $0x18] sm:$0xf]
        %v236 = vld [vmem:[%s221 + $0x1c] sm:$0xf]
        %v237 = vld [vmem:[%s221 + $0x20] sm:$0xf]
        %v238 = vld [vmem:[%s221 + $0x24] sm:$0xf]
        %v239 = vld [vmem:[%s221 + $0x28] sm:$0xf]
        %v240 = vld [vmem:[%s221 + $0x2c] sm:$0xf]
        %v241 = vld [vmem:[%s221 + $0x30] sm:$0xf]
        %v242 = vld [vmem:[%s221 + $0x34] sm:$0xf]
        %v243 = vld [vmem:[%s221 + $0x38] sm:$0xf]
        %v244 = vld [vmem:[%s221 + $0x3c] sm:$0xf]
        %v245 = vld [vmem:[%s221 + $0x40] sm:$0xf]
        %v246 = vld [vmem:[%s221 + $0x44] sm:$0xf]
        %v247 = vld [vmem:[%s221 + $0x48] sm:$0xf]
        %v248 = vld [vmem:[%s221 + $0x4c] sm:$0xf]
        %v249 = vld [vmem:[%s221 + $0x50] sm:$0xf]
        %v250 = vld [vmem:[%s221 + $0x54] sm:$0xf]
        %v251 = vld [vmem:[%s221 + $0x58] sm:$0xf]
        %v252 = vld [vmem:[%s221 + $0x5c] sm:$0xf]
        %v253 = vld [vmem:[%s221 + $0x60] sm:$0xf]
        %v254 = vld [vmem:[%s221 + $0x64] sm:$0xf]
        %v255 = vld [vmem:[%s221 + $0x68] sm:$0xf]
        %v256 = vld [vmem:[%s221 + $0x6c] sm:$0xf]
        %v257 = vld [vmem:[%s221 + $0x70] sm:$0xf]
        %v258 = vld [vmem:[%s221 + $0x74] sm:$0xf]
        %v259 = vld [vmem:[%s221 + $0x78] sm:$0xf]
        %v260 = vld [vmem:[%s221 + $0x7c] sm:$0xf]
        %v261 = vld [vmem:[%s1] sm:$0xf]
        %v262 = vld [vmem:[%s1 + $0x4] sm:$0xf]
        %v263 = vld [vmem:[%s1 + $0x8] sm:$0xf]
        %v264 = vld [vmem:[%s1 + $0xc] sm:$0xf]
        %v265 = vld [vmem:[%s1 + $0x10] sm:$0xf]
        %v266 = vld [vmem:[%s1 + $0x14] sm:$0xf]
        %v299 = vunpack.c.l.b16 %v229
        %v300 = vunpack.c.l.b16 %v230
        %v301 = vunpack.c.l.b16 %v231
        %v302 = vunpack.c.l.b16 %v232
        %v303 = vunpack.c.l.b16 %v233
        %v304 = vunpack.c.l.b16 %v234
        %v305 = vunpack.c.l.b16 %v235
        %v306 = vunpack.c.l.b16 %v236
        %v307 = vunpack.c.l.b16 %v237
        %v308 = vunpack.c.l.b16 %v238
        %v309 = vunpack.c.l.b16 %v239
        %v310 = vunpack.c.l.b16 %v240
        %v311 = vunpack.c.l.b16 %v241
        %v312 = vunpack.c.l.b16 %v242
        %v313 = vunpack.c.l.b16 %v243
        %v314 = vunpack.c.l.b16 %v244
        %v315 = vunpack.c.l.b16 %v245
        %v316 = vunpack.c.l.b16 %v246
        %v317 = vunpack.c.l.b16 %v247
        %v318 = vunpack.c.l.b16 %v248
        %v319 = vunpack.c.l.b16 %v249
        %v320 = vunpack.c.l.b16 %v250
        %v321 = vunpack.c.l.b16 %v251
        %v322 = vunpack.c.l.b16 %v252
        %v323 = vunpack.c.l.b16 %v253
        %v324 = vunpack.c.l.b16 %v254
        %v325 = vunpack.c.l.b16 %v255
        %v326 = vunpack.c.l.b16 %v256
        %v327 = vunpack.c.l.b16 %v257
        %v328 = vunpack.c.l.b16 %v258
        %v329 = vunpack.c.l.b16 %v259
        %v330 = vunpack.c.l.b16 %v260
        %v331 = vpack.c.b16 %v300, %v299
        %v332 = vpack.c.b16 %v302, %v301
        %v333 = vpack.c.b16 %v304, %v303
        %v334 = vpack.c.b16 %v306, %v305
        %v335 = vpack.c.b16 %v308, %v307
        %v336 = vpack.c.b16 %v310, %v309
        %v337 = vpack.c.b16 %v312, %v311
        %v338 = vpack.c.b16 %v314, %v313
        %v339 = vpack.c.b16 %v316, %v315
        %v340 = vpack.c.b16 %v318, %v317
        %v341 = vpack.c.b16 %v320, %v319
        %v342 = vpack.c.b16 %v322, %v321
        %v343 = vpack.c.b16 %v324, %v323
        %v344 = vpack.c.b16 %v326, %v325
        %v345 = vpack.c.b16 %v328, %v327
        %v346 = vpack.c.b16 %v330, %v329
        %v353 = vunpack.c.l.b16 %v261
        %v354 = vunpack.c.l.b16 %v262
        %v355 = vunpack.c.l.b16 %v263
        %v356 = vunpack.c.l.b16 %v264
        %v357 = vunpack.c.l.b16 %v265
        %v358 = vunpack.c.l.b16 %v266
        %v359 = vpack.c.b16 %v354, %v353
        %v360 = vpack.c.b16 %v356, %v355
        %v361 = vpack.c.b16 %v358, %v357
        %vm365 = vcmask 392192
        %v367 = vsel %vm365, %v331, 0
        %v370 = vsel %vm365, %v332, 0
        %v373 = vsel %vm365, %v333, 0
        %v376 = vsel %vm365, %v334, 0
        %v379 = vsel %vm365, %v335, 0
        %v382 = vsel %vm365, %v336, 0
        %v385 = vsel %vm365, %v337, 0
        %v388 = vsel %vm365, %v338, 0
        %v391 = vsel %vm365, %v339, 0
        %v394 = vsel %vm365, %v340, 0
        %v397 = vsel %vm365, %v341, 0
        %v400 = vsel %vm365, %v342, 0
        %v403 = vsel %vm365, %v343, 0
        %v406 = vsel %vm365, %v344, 0
        %v409 = vsel %vm365, %v345, 0
        %v412 = vsel %vm365, %v346, 0
        %414 = vmatprep.subr.bf16.mxu0 0
        %415 = vmatpush1.bf16.msra.mxu0 0
        %416 = vmatprep.subr.bf16.mxu0 0
        %417 = vmatpush1.bf16.msra.mxu0 0
        %418 = vmatprep.subr.bf16.mxu0 0
        %419 = vmatpush1.bf16.msra.mxu0 0
        %420 = vmatprep.subr.bf16.mxu0 0
        %421 = vmatpush1.bf16.msra.mxu0 0
        %422 = vmatprep.subr.bf16.mxu0 0
        %423 = vmatpush1.bf16.msra.mxu0 0
        %424 = vmatprep.subr.bf16.mxu0 0
        %425 = vmatpush1.bf16.msra.mxu0 %v361
        %426 = vmatprep.subr.bf16.mxu0 0
        %427 = vmatpush1.bf16.msra.mxu0 %v360
        %428 = vmatprep.subr.bf16.mxu0 0
        %429 = vmatpush1.bf16.msra.mxu0 %v359
        %430 = vmatprep.subr.bf16.mxu0 0
        %431 = vmatpush2.bf16.msra.mxu0 0
        %432 = vmatprep.subr.bf16.mxu0 0
        %433 = vmatpush2.bf16.msra.mxu0 0
        %434 = vmatprep.subr.bf16.mxu0 0
        %435 = vmatpush2.bf16.msra.mxu0 0
        %436 = vmatprep.subr.bf16.mxu0 0
        %437 = vmatpush2.bf16.msra.mxu0 0
        %438 = vmatprep.subr.bf16.mxu0 0
        %439 = vmatpush2.bf16.msra.mxu0 0
        %440 = vmatprep.subr.bf16.mxu0 0
        %441 = vmatpush2.bf16.msra.mxu0 0
        %442 = vmatprep.subr.bf16.mxu0 0
        %443 = vmatpush2.bf16.msra.mxu0 0
        %444 = vmatprep.subr.bf16.mxu0 0
        %445 = vmatpush2.bf16.msra.mxu0 0
        %446 = vmatprep.mubr.bf16.mxu0 0
        %447 = vmatmul.mubr.bf16.gmra.mxu0 %v367
        %v448 = vpop.f32.mrf.mxu0
        %v449 = vadd.f32 0.0, %v448
        %v450 = vpop.f32.mrf.mxu0
        %v451 = vpop.f32.mrf.mxu0
        %v452 = vadd.f32 0.0, %v451
        %v453 = vpop.f32.mrf.mxu0
        %454 = vmatprep.mubr.bf16.mxu0 0
        %455 = vmatmul.mubr.bf16.gmra.mxu0 %v370
        %v456 = vpop.f32.mrf.mxu0
        %v457 = vadd.f32 0.0, %v456
        %v458 = vpop.f32.mrf.mxu0
        %v459 = vpop.f32.mrf.mxu0
        %v460 = vadd.f32 0.0, %v459
        %v461 = vpop.f32.mrf.mxu0
        %462 = vmatprep.mubr.bf16.mxu0 0
        %463 = vmatmul.mubr.bf16.gmra.mxu0 %v373
        %v464 = vpop.f32.mrf.mxu0
        %v465 = vadd.f32 0.0, %v464
        %v466 = vpop.f32.mrf.mxu0
        %v467 = vpop.f32.mrf.mxu0
        %v468 = vadd.f32 0.0, %v467
        %v469 = vpop.f32.mrf.mxu0
        %470 = vmatprep.mubr.bf16.mxu0 0
        %471 = vmatmul.mubr.bf16.gmra.mxu0 %v376
        %v472 = vpop.f32.mrf.mxu0
        %v473 = vadd.f32 0.0, %v472
        %v474 = vpop.f32.mrf.mxu0
        %v475 = vpop.f32.mrf.mxu0
        %v476 = vadd.f32 0.0, %v475
        %v477 = vpop.f32.mrf.mxu0
        %478 = vmatprep.mubr.bf16.mxu0 0
        %479 = vmatmul.mubr.bf16.gmra.mxu0 %v379
        %v480 = vpop.f32.mrf.mxu0
        %v481 = vadd.f32 0.0, %v480
        %v482 = vpop.f32.mrf.mxu0
        %v483 = vpop.f32.mrf.mxu0
        %v484 = vadd.f32 0.0, %v483
        %v485 = vpop.f32.mrf.mxu0
        %486 = vmatprep.mubr.bf16.mxu0 0
        %487 = vmatmul.mubr.bf16.gmra.mxu0 %v382
        %v488 = vpop.f32.mrf.mxu0
        %v489 = vadd.f32 0.0, %v488
        %v490 = vpop.f32.mrf.mxu0
        %v491 = vpop.f32.mrf.mxu0
        %v492 = vadd.f32 0.0, %v491
        %v493 = vpop.f32.mrf.mxu0
        %494 = vmatprep.mubr.bf16.mxu0 0
        %495 = vmatmul.mubr.bf16.gmra.mxu0 %v385
        %v496 = vpop.f32.mrf.mxu0
        %v497 = vadd.f32 0.0, %v496
        %v498 = vpop.f32.mrf.mxu0
        %v499 = vpop.f32.mrf.mxu0
        %v500 = vadd.f32 0.0, %v499
        %v501 = vpop.f32.mrf.mxu0
        %502 = vmatprep.mubr.bf16.mxu0 0
        %503 = vmatmul.mubr.bf16.gmra.mxu0 %v388
        %v504 = vpop.f32.mrf.mxu0
        %v505 = vadd.f32 0.0, %v504
        %v506 = vpop.f32.mrf.mxu0
        %v507 = vpop.f32.mrf.mxu0
        %v508 = vadd.f32 0.0, %v507
        %v509 = vpop.f32.mrf.mxu0
        %510 = vmatprep.mubr.bf16.mxu0 0
        %511 = vmatmul.mubr.bf16.gmra.mxu0 %v391
        %v512 = vpop.f32.mrf.mxu0
        %v513 = vadd.f32 0.0, %v512
        %v514 = vpop.f32.mrf.mxu0
        %v515 = vpop.f32.mrf.mxu0
        %v516 = vadd.f32 0.0, %v515
        %v517 = vpop.f32.mrf.mxu0
        %518 = vmatprep.mubr.bf16.mxu0 0
        %519 = vmatmul.mubr.bf16.gmra.mxu0 %v394
        %v520 = vpop.f32.mrf.mxu0
        %v521 = vadd.f32 0.0, %v520
        %v522 = vpop.f32.mrf.mxu0
        %v523 = vpop.f32.mrf.mxu0
        %v524 = vadd.f32 0.0, %v523
        %v525 = vpop.f32.mrf.mxu0
        %526 = vmatprep.mubr.bf16.mxu0 0
        %527 = vmatmul.mubr.bf16.gmra.mxu0 %v397
        %v528 = vpop.f32.mrf.mxu0
        %v529 = vadd.f32 0.0, %v528
        %v530 = vpop.f32.mrf.mxu0
        %v531 = vpop.f32.mrf.mxu0
        %v532 = vadd.f32 0.0, %v531
        %v533 = vpop.f32.mrf.mxu0
        %534 = vmatprep.mubr.bf16.mxu0 0
        %535 = vmatmul.mubr.bf16.gmra.mxu0 %v400
        %v536 = vpop.f32.mrf.mxu0
        %v537 = vadd.f32 0.0, %v536
        %v538 = vpop.f32.mrf.mxu0
        %v539 = vpop.f32.mrf.mxu0
        %v540 = vadd.f32 0.0, %v539
        %v541 = vpop.f32.mrf.mxu0
        %542 = vmatprep.mubr.bf16.mxu0 0
        %543 = vmatmul.mubr.bf16.gmra.mxu0 %v403
        %v544 = vpop.f32.mrf.mxu0
        %v545 = vadd.f32 0.0, %v544
        %v546 = vpop.f32.mrf.mxu0
        %v547 = vpop.f32.mrf.mxu0
        %v548 = vadd.f32 0.0, %v547
        %v549 = vpop.f32.mrf.mxu0
        %550 = vmatprep.mubr.bf16.mxu0 0
        %551 = vmatmul.mubr.bf16.gmra.mxu0 %v406
        %v552 = vpop.f32.mrf.mxu0
        %v553 = vadd.f32 0.0, %v552
        %v554 = vpop.f32.mrf.mxu0
        %v555 = vpop.f32.mrf.mxu0
        %v556 = vadd.f32 0.0, %v555
        %v557 = vpop.f32.mrf.mxu0
        %558 = vmatprep.mubr.bf16.mxu0 0
        %559 = vmatmul.mubr.bf16.gmra.mxu0 %v409
        %v560 = vpop.f32.mrf.mxu0
        %v561 = vadd.f32 0.0, %v560
        %v562 = vpop.f32.mrf.mxu0
        %v563 = vpop.f32.mrf.mxu0
        %v564 = vadd.f32 0.0, %v563
        %v565 = vpop.f32.mrf.mxu0
        %566 = vmatprep.mubr.bf16.mxu0 0
        %567 = vmatmul.mubr.bf16.gmra.mxu0 %v412
        %v568 = vpop.f32.mrf.mxu0
        %v569 = vadd.f32 0.0, %v568
        %v570 = vpop.f32.mrf.mxu0
        %v571 = vpop.f32.mrf.mxu0
        %v572 = vadd.f32 0.0, %v571
        %v573 = vpop.f32.mrf.mxu0
        %574 = vdwg.mxu0
        %v575 = vmax.f32 %v449, 0.0
        %v576 = vmax.f32 %v452, 0.0
        %v577 = vmax.f32 %v457, 0.0
        %v578 = vmax.f32 %v460, 0.0
        %v579 = vmax.f32 %v465, 0.0
        %v580 = vmax.f32 %v468, 0.0
        %v581 = vmax.f32 %v473, 0.0
        %v582 = vmax.f32 %v476, 0.0
        %v583 = vmax.f32 %v481, 0.0
        %v584 = vmax.f32 %v484, 0.0
        %v585 = vmax.f32 %v489, 0.0
        %v586 = vmax.f32 %v492, 0.0
        %v587 = vmax.f32 %v497, 0.0
        %v588 = vmax.f32 %v500, 0.0
        %v589 = vmax.f32 %v505, 0.0
        %v590 = vmax.f32 %v508, 0.0
        %v591 = vmax.f32 %v513, 0.0
        %v592 = vmax.f32 %v516, 0.0
        %v593 = vmax.f32 %v521, 0.0
        %v594 = vmax.f32 %v524, 0.0
        %v595 = vmax.f32 %v529, 0.0
        %v596 = vmax.f32 %v532, 0.0
        %v597 = vmax.f32 %v537, 0.0
        %v598 = vmax.f32 %v540, 0.0
        %v599 = vmax.f32 %v545, 0.0
        %v600 = vmax.f32 %v548, 0.0
        %v601 = vmax.f32 %v553, 0.0
        %v602 = vmax.f32 %v556, 0.0
        %v603 = vmax.f32 %v561, 0.0
        %v604 = vmax.f32 %v564, 0.0
        %v605 = vmax.f32 %v569, 0.0
        %v606 = vmax.f32 %v572, 0.0
        %v607 = vld [vmem:[#allocation2] sm:$0x1]
        %v608 = vadd.f32 %v575, %v576
        %v609 = vadd.f32 %v608, %v577
        %v610 = vadd.f32 %v609, %v578
        %v611 = vadd.f32 %v610, %v579
        %v612 = vadd.f32 %v611, %v580
        %v613 = vadd.f32 %v612, %v581
        %v614 = vadd.f32 %v613, %v582
        %v615 = vadd.f32 %v614, %v583
        %v616 = vadd.f32 %v615, %v584
        %v617 = vadd.f32 %v616, %v585
        %v618 = vadd.f32 %v617, %v586
        %v619 = vadd.f32 %v618, %v587
        %v620 = vadd.f32 %v619, %v588
        %v621 = vadd.f32 %v620, %v589
        %v622 = vadd.f32 %v621, %v590
        %v623 = vadd.f32 %v622, %v591
        %v624 = vadd.f32 %v623, %v592
        %v625 = vadd.f32 %v624, %v593
        %v626 = vadd.f32 %v625, %v594
        %v627 = vadd.f32 %v626, %v595
        %v628 = vadd.f32 %v627, %v596
        %v629 = vadd.f32 %v628, %v597
        %v630 = vadd.f32 %v629, %v598
        %v631 = vadd.f32 %v630, %v599
        %v632 = vadd.f32 %v631, %v600
        %v633 = vadd.f32 %v632, %v601
        %v634 = vadd.f32 %v633, %v602
        %v635 = vadd.f32 %v634, %v603
        %v636 = vadd.f32 %v635, %v604
        %v637 = vadd.f32 %v636, %v605
        %v638 = vadd.f32 %v637, %v606
        %v639 = vrot.slane %v638, 4
        %v640 = vadd.f32 %v638, %v639
        %v641 = vrot.slane %v640, 2
        %v642 = vadd.f32 %v640, %v641
        %v643 = vrot.slane %v642, 1
        %v644 = vadd.f32 %v642, %v643
        %v645 = vadd.f32 %v607, %v644
        %646 = vst [vmem:[#allocation2] sm:$0x1] %v645
        // Predicated region
        $region41: #{tpu_custom_call.1} parent=35 // pred_check
          %p647 = pneg %p224
        $region42: #{tpu_custom_call.1} parent=35 // pred_check_branch
          %649 = sbr.rel (%p647) target = $region44
        $region43: #{tpu_custom_call.1} parent=35 // pred_region
          %v650 = vld [vmem:[#allocation2] sm:$0x1]
          %v651 = vmul.f32 %v650, 0.00390625
          %v652 = vld [vmem:[%s2] sm:$0xff]
          %v653 = vld [vmem:[%s2 + $0x8] sm:$0xff]
          %v654 = vld [vmem:[%s2 + $0x10] sm:$0xff]
          %v655 = vld [vmem:[%s2 + $0x18] sm:$0xff]
          %v656 = vld [vmem:[%s2 + $0x20] sm:$0xff]
          %v657 = vld [vmem:[%s2 + $0x28] sm:$0xff]
          %v658 = vld [vmem:[%s2 + $0x30] sm:$0xff]
          %v659 = vld [vmem:[%s2 + $0x38] sm:$0xff]
          %v660 = vld [vmem:[%s2 + $0x40] sm:$0xff]
          %v661 = vld [vmem:[%s2 + $0x48] sm:$0xff]
          %v662 = vld [vmem:[%s2 + $0x50] sm:$0xff]
          %v663 = vld [vmem:[%s2 + $0x58] sm:$0xff]
          %v664 = vld [vmem:[%s2 + $0x60] sm:$0xff]
          %v665 = vld [vmem:[%s2 + $0x68] sm:$0xff]
          %v666 = vld [vmem:[%s2 + $0x70] sm:$0xff]
          %v667 = vld [vmem:[%s2 + $0x78] sm:$0xff]
          %v668 = vld [vmem:[%s3] sm:$0x1]
          %669 = vmatprep.subr.mxu0 0.0
          %670 = vmatpush1.msra.mxu0 %v667
          %671 = vmatprep.subr.mxu0 0.0
          %672 = vmatpush1.msra.mxu0 %v666
          %673 = vmatprep.subr.mxu0 0.0
          %674 = vmatpush1.msra.mxu0 %v665
          %675 = vmatprep.subr.mxu0 0.0
          %676 = vmatpush1.msra.mxu0 %v664
          %677 = vmatprep.subr.mxu0 0.0
          %678 = vmatpush1.msra.mxu0 %v663
          %679 = vmatprep.subr.mxu0 0.0
          %680 = vmatpush1.msra.mxu0 %v662
          %681 = vmatprep.subr.mxu0 0.0
          %682 = vmatpush1.msra.mxu0 %v661
          %683 = vmatprep.subr.mxu0 0.0
          %684 = vmatpush1.msra.mxu0 %v660
          %685 = vmatprep.subr.mxu0 0.0
          %686 = vmatpush1.msra.mxu0 %v659
          %687 = vmatprep.subr.mxu0 0.0
          %688 = vmatpush1.msra.mxu0 %v658
          %689 = vmatprep.subr.mxu0 0.0
          %690 = vmatpush1.msra.mxu0 %v657
          %691 = vmatprep.subr.mxu0 0.0
          %692 = vmatpush1.msra.mxu0 %v656
          %693 = vmatprep.subr.mxu0 0.0
          %694 = vmatpush1.msra.mxu0 %v655
          %695 = vmatprep.subr.mxu0 0.0
          %696 = vmatpush1.msra.mxu0 %v654
          %697 = vmatprep.subr.mxu0 0.0
          %698 = vmatpush1.msra.mxu0 %v653
          %699 = vmatprep.subr.mxu0 0.0
          %700 = vmatpush1.msra.mxu0 %v652
          %701 = vmatprep.subr.mxu0 0.0
          %702 = vmatpush2.msra.mxu0 0.0
          %703 = vmatprep.subr.mxu0 0.0
          %704 = vmatpush2.msra.mxu0 0.0
          %705 = vmatprep.subr.mxu0 0.0
          %706 = vmatpush2.msra.mxu0 0.0
          %707 = vmatprep.subr.mxu0 0.0
          %708 = vmatpush2.msra.mxu0 0.0
          %709 = vmatprep.subr.mxu0 0.0
          %710 = vmatpush2.msra.mxu0 0.0
          %711 = vmatprep.subr.mxu0 0.0
          %712 = vmatpush2.msra.mxu0 0.0
          %713 = vmatprep.subr.mxu0 0.0
          %714 = vmatpush2.msra.mxu0 0.0
          %715 = vmatprep.subr.mxu0 0.0
          %716 = vmatpush2.msra.mxu0 0.0
          %717 = vmatprep.subr.mxu0 0.0
          %718 = vmatpush2.msra.mxu0 0.0
          %719 = vmatprep.subr.mxu0 0.0
          %720 = vmatpush2.msra.mxu0 0.0
          %721 = vmatprep.subr.mxu0 0.0
          %722 = vmatpush2.msra.mxu0 0.0
          %723 = vmatprep.subr.mxu0 0.0
          %724 = vmatpush2.msra.mxu0 0.0
          %725 = vmatprep.subr.mxu0 0.0
          %726 = vmatpush2.msra.mxu0 0.0
          %727 = vmatprep.subr.mxu0 0.0
          %728 = vmatpush2.msra.mxu0 0.0
          %729 = vmatprep.subr.mxu0 0.0
          %730 = vmatpush2.msra.mxu0 0.0
          %731 = vmatprep.subr.mxu0 0.0
          %732 = vmatpush2.msra.mxu0 0.0
          %733 = vmatprep.mubr.f32.mxu0 0.0
          %734 = vmatmul.mubr.f32.gmra.mxu0 %v651
          %v735 = vpop.f32.mrf.mxu0
          %v736 = vadd.f32 %v668, %v735
          %v737 = vpop.f32.mrf.mxu0
          %738 = vdwg.mxu0
          %739 = vst [vmem:[%s212] sm:$0x1] %v736
        $region44: #{tpu_custom_call.1} parent=35 // pred_fallthru
          _
        %s740 = sand.u32 %s129, 1
        %s741 = scalar_lea.sflag [#allocation4], %s740
        %s742 = sand.u32 %s129, 1
        %s743 = scalar_lea.vmem [#allocation3], %s742
        // Predicated region
        $region45: #{tpu_custom_call.1} parent=35 // pred_check
          %p744 = pneg %p139
        $region46: #{tpu_custom_call.1} parent=35 // pred_check_branch
          %746 = sbr.rel (%p744) target = $region48
        $region47: #{tpu_custom_call.1} parent=35 // pred_region
          %s748 = ssub.s32 16, 16
          %749 = vsyncadd %s741, %s748
          %s750 = smul.addr %s22, 16
          %s751 = scalar_lea.hbm %s4, %s750
          %s753 = sshll.u32 %s743, 4
          %s754 = int_to_ptr.vmem [resolvable:$true] %s753
          %756 = dma.vmem_to_hbm [thread:$0]  %s754, 16, %s751, %s741
        $region48: #{tpu_custom_call.1} parent=35 // pred_fallthru
          _
      $region36: #{tpu_custom_call.1} parent=5 // pred_fallthru
        _
      %p757 = scmp.le.s32.totalorder 2, %s13
      // Predicated region
      $region49: #{tpu_custom_call.1} parent=5 // pred_check
        %p758 = pneg %p757
      $region50: #{tpu_custom_call.1} parent=5 // pred_check_branch
        %760 = sbr.rel (%p758) target = $region52
      $region51: #{tpu_custom_call.1} parent=5 // pred_region
        %s761 = ssub.s32 %s13, 2
        // Predicated region
        $region53: #{tpu_custom_call.1} parent=51 // pred_check
          %p762 = pneg %p145
        $region54: #{tpu_custom_call.1} parent=51 // pred_check_branch
          %764 = sbr.rel (%p762) target = $region56
        $region55: #{tpu_custom_call.1} parent=51 // pred_region
          %s765 = sand.u32 %s130, 1
          %s766 = scalar_lea.sflag [#allocation4], %s765
          %s767 = sand.u32 %s130, 1
          %s768 = scalar_lea.vmem [#allocation3], %s767
          %769 = dma.done %s766, 16
        $region56: #{tpu_custom_call.1} parent=51 // pred_fallthru
          _
      $region52: #{tpu_custom_call.1} parent=5 // pred_fallthru
        _
    $region6: #{tpu_custom_call.1} parent=1 // loop_footer
      %s17 = sadd.s32 1, %s13
    $region7: #{tpu_custom_call.1} parent=1 // loop_footer_branch
      %12 = sbr.rel target = $region3
    $region8: #{tpu_custom_call.1} parent=1 // loop_exit
      _
    %770 = vsyncpa [#allocation4], 1
    %s771 = scalar_lea.sflag [#allocation4], 1
    %772 = vsyncpa %s771, 1

</llo_original>
